<compile_context>
chip_gen: v7x
topology: tpu7x:2x2x1
jax: 0.10.0
libtpu: 0.0.40
codegen_flags: <defaults>
</compile_context>

<pallas_src>
from typing import NamedTuple

import jax
import jax.numpy as jnp
from jax.experimental import pallas as pl
from jax.experimental.pallas import tpu as pltpu


# ---------------------------------------------------------------------------
# Kernels
# ---------------------------------------------------------------------------

def mlp_kernel(x_ref, w1_ref, b1_ref, w2_ref, b2_ref, o_ref):
    """Weight-resident path.  x_ref:(tm,I) f32, w1:(I,Hp) bf16, w2:(Hp,Cp) bf16."""
    x = x_ref[...].astype(jnp.bfloat16)                                 # in-kernel cast (VPU)
    h = jnp.dot(x, w1_ref[...], preferred_element_type=jnp.float32)     # MXU, f32 acc
    h = jnp.maximum(h + b1_ref[...], 0.0)                               # bias + ReLU in f32
    out = jnp.dot(h.astype(jnp.bfloat16), w2_ref[...],                  # MXU, f32 acc
                  preferred_element_type=jnp.float32)
    o_ref[...] = (out + b2_ref[...]).astype(o_ref.dtype)


def mlp_kernel_ktiled(x_ref, w1_ref, b1_ref, w2_ref, b2_ref, o_ref, acc_ref):
    """K-tiled fallback for large input/hidden sizes that don't fit VMEM-resident.
    Grid = (batch_tiles, k_tiles); acc_ref holds the f32 hidden pre-activation."""
    k = pl.program_id(1)

    @pl.when(k == 0)
    def _():
        acc_ref[...] = jnp.zeros_like(acc_ref)

    acc_ref[...] += jnp.dot(x_ref[...].astype(jnp.bfloat16), w1_ref[...],
                            preferred_element_type=jnp.float32)

    @pl.when(k == pl.num_programs(1) - 1)
    def _():
        h = jnp.maximum(acc_ref[...] + b1_ref[...], 0.0)
        out = jnp.dot(h.astype(jnp.bfloat16), w2_ref[...],
                      preferred_element_type=jnp.float32)
        o_ref[...] = (out + b2_ref[...]).astype(o_ref.dtype)


# ---------------------------------------------------------------------------
# Parameter preparation (done ONCE, not per forward call)
# ---------------------------------------------------------------------------

def _round_up(n, m):
    return ((n + m - 1) // m) * m


# Resident bf16 (W1 + W2) budget before switching to the K-tiled layout
# (conservative w.r.t. v7x's 64 MiB physical / 32 MiB default-scoped VMEM).
_K_TILE_WEIGHT_BUDGET = 24 << 20


class MLPParams(NamedTuple):
    w1: jax.Array        # (I or Ip, Hp) bf16
    b1: jax.Array        # (1, Hp) f32
    w2: jax.Array        # (Hp, Cp) bf16
    b2: jax.Array        # (1, Cp) f32
    input_size: int
    hidden: int
    classes: int
    k_tiled: bool


def prepare_params(w1, b1, w2, b2, *, force_k_tiling=False):
    """Pad/cast the PyTorch-equivalent parameters once.  w1:(I,H), w2:(H,C) (already (in,out))."""
    I, H = w1.shape
    H2, C = w2.shape
    assert H2 == H
    Hp = _round_up(H, 128)
    Cp = _round_up(C, 128)

    resident_weight_bytes = I * Hp * 2 + Hp * Cp * 2
    k_tiled = bool(force_k_tiling or resident_weight_bytes > _K_TILE_WEIGHT_BUDGET)
    # Resident path keeps K = I unpadded (full-extent block is legal); K-tiled path
    # needs K to be a multiple of the K tile, so pad it to 128 there.
    Ip = _round_up(I, 128) if k_tiled else I

    w1p = jnp.zeros((Ip, Hp), jnp.bfloat16).at[:I, :H].set(w1.astype(jnp.bfloat16))
    b1p = jnp.zeros((1, Hp), jnp.float32).at[:, :H].set(b1.astype(jnp.float32))
    w2p = jnp.zeros((Hp, Cp), jnp.bfloat16).at[:H, :C].set(w2.astype(jnp.bfloat16))
    b2p = jnp.zeros((1, Cp), jnp.float32).at[:, :C].set(b2.astype(jnp.float32))
    return MLPParams(w1p, b1p, w2p, b2p, I, H, C, k_tiled)


# ---------------------------------------------------------------------------
# Forward
# ---------------------------------------------------------------------------

def _choose_tm(B, tm_max=512):
    """Batch tile: multiple of 16 (bf16 packing), >=2 tiles when possible (v7x megacore),
    minimal batch padding, capped at tm_max to amortize per-step overhead."""
    Bq = _round_up(B, 16)
    if Bq <= 16:
        return Bq
    tm = _round_up(pl.cdiv(Bq, 2), 16)
    return min(tm, tm_max)


def _vmem_limit(nbytes):
    # 2x headroom + 2 MiB slack; stay within v7x's 64 MiB physical VMEM.
    return int(min(max(2 * nbytes + (2 << 20), 8 << 20), 64 << 20))


def _resident_call(x, p, tm, Bp, I, Hp, Cp):
    grid = (Bp // tm,)
    need = (2 * tm * I * 4                                            # x tile (double-buffered)
            + p.w1.size * 2 + p.w2.size * 2 + p.b1.size * 4 + p.b2.size * 4  # single-buffered
            + 2 * tm * Cp * 4                                         # out tile (double-buffered)
            + tm * Hp * 4)                                            # hidden working set
    cost = pl.CostEstimate(
        flops=2 * Bp * (I * Hp + Hp * Cp),
        transcendentals=0,
        bytes_accessed=(Bp * I * 4 + p.w1.size * 2 + p.w2.size * 2
                        + p.b1.size * 4 + p.b2.size * 4 + Bp * Cp * 4),
    )
    return pl.pallas_call(
        mlp_kernel,
        out_shape=jax.ShapeDtypeStruct((Bp, Cp), jnp.float32),
        grid_spec=pltpu.PrefetchScalarGridSpec(
            num_scalar_prefetch=0,
            grid=grid,
            in_specs=[
                pl.BlockSpec((tm, I), lambda i: (i, 0)),              # x tile, pipelined
                pl.BlockSpec((I, Hp), lambda i: (0, 0), pipeline_mode=pl.Buffered(1)),
                pl.BlockSpec((1, Hp), lambda i: (0, 0), pipeline_mode=pl.Buffered(1)),
                pl.BlockSpec((Hp, Cp), lambda i: (0, 0), pipeline_mode=pl.Buffered(1)),
                pl.BlockSpec((1, Cp), lambda i: (0, 0), pipeline_mode=pl.Buffered(1)),
            ],
            out_specs=pl.BlockSpec((tm, Cp), lambda i: (i, 0)),       # lane-dense (Cp % 128 == 0)
        ),
        compiler_params=pltpu.CompilerParams(
            dimension_semantics=("parallel",),
            vmem_limit_bytes=_vmem_limit(need),
        ),
        cost_estimate=cost,
    )(x, p.w1, p.b1, p.w2, p.b2)


def _ktiled_call(x, p, tm, tk, Bp, Ip, Hp, Cp):
    grid = (Bp // tm, Ip // tk)
    need = (2 * tm * tk * 4 + 2 * tk * Hp * 2                         # x / W1 K-tiles (dbl-buf)
            + p.w2.size * 2 + p.b1.size * 4 + p.b2.size * 4           # resident, single-buffered
            + 2 * tm * Cp * 4 + tm * Hp * 4)                          # out tile + f32 accumulator
    cost = pl.CostEstimate(
        flops=2 * Bp * (Ip * Hp + Hp * Cp),
        transcendentals=0,
        bytes_accessed=(Bp * Ip * 4 + (Bp // tm) * p.w1.size * 2
                        + p.w2.size * 2 + Bp * Cp * 4),
    )
    return pl.pallas_call(
        mlp_kernel_ktiled,
        out_shape=jax.ShapeDtypeStruct((Bp, Cp), jnp.float32),
        grid_spec=pltpu.PrefetchScalarGridSpec(
            num_scalar_prefetch=0,
            grid=grid,
            in_specs=[
                pl.BlockSpec((tm, tk), lambda i, k: (i, k)),
                pl.BlockSpec((tk, Hp), lambda i, k: (k, 0)),
                pl.BlockSpec((1, Hp), lambda i, k: (0, 0), pipeline_mode=pl.Buffered(1)),
                pl.BlockSpec((Hp, Cp), lambda i, k: (0, 0), pipeline_mode=pl.Buffered(1)),
                pl.BlockSpec((1, Cp), lambda i, k: (0, 0), pipeline_mode=pl.Buffered(1)),
            ],
            out_specs=pl.BlockSpec((tm, Cp), lambda i, k: (i, 0)),
            scratch_shapes=[pltpu.VMEM((tm, Hp), jnp.float32)],
        ),
        compiler_params=pltpu.CompilerParams(
            dimension_semantics=("parallel", "arbitrary"),
            vmem_limit_bytes=_vmem_limit(need),
        ),
        cost_estimate=cost,
    )(x, p.w1, p.b1, p.w2, p.b2)


def neural_net_forward(x, params: MLPParams, *, tm_max=512):
    """x: (B, input_size) f32.  params: output of prepare_params (built once)."""
    B, I = x.shape
    assert I == params.input_size
    Hp = params.w1.shape[1]
    Cp = params.w2.shape[1]
    C = params.classes

    tm = _choose_tm(B, tm_max)
    Bp = _round_up(B, tm)

    if params.k_tiled:
        Ip = params.w1.shape[0]
        tk = 512 if Ip % 512 == 0 else (256 if Ip % 256 == 0 else 128)
        if Bp != B or Ip != I:
            x = jnp.pad(x, ((0, Bp - B), (0, Ip - I)))
        out_p = _ktiled_call(x, params, tm, tk, Bp, Ip, Hp, Cp)
    else:
        if Bp != B:
            x = jnp.pad(x, ((0, Bp - B), (0, 0)))   # rows only; no copy at all if B % tm == 0
        out_p = _resident_call(x, params, tm, Bp, I, Hp, Cp)

    # Slice padded batch rows / padded class lanes back to the true logits.
    return out_p[:B, :C]


# ---------------------------------------------------------------------------
# Demo / self-test
# ---------------------------------------------------------------------------

if __name__ == "__main__":
    batch = 64
    input_size = 64
    hidden_size = 32
    num_classes = 10

    key = jax.random.PRNGKey(0)
    kx, kw1, kb1, kw2, kb2 = jax.random.split(key, 5)

    x = jax.random.normal(kx, (batch, input_size), dtype=jnp.float32)
    w1 = jax.random.normal(kw1, (input_size, hidden_size), dtype=jnp.float32) * 0.05
    b1 = jax.random.normal(kb1, (hidden_size,), dtype=jnp.float32) * 0.05
    w2 = jax.random.normal(kw2, (hidden_size, num_classes), dtype=jnp.float32) * 0.05
    b2 = jax.random.normal(kb2, (num_classes,), dtype=jnp.float32) * 0.05

    # --- weight-resident path (the normal case) ---
    params = prepare_params(w1, b1, w2, b2)          # done once, reused across calls
    out = jax.block_until_ready(neural_net_forward(x, params))
    ref = jnp.maximum(x @ w1 + b1, 0.0) @ w2 + b2
    assert out.shape == (batch, num_classes)
    assert jnp.allclose(out, ref, atol=5e-2, rtol=5e-2), (
        f"resident-path max abs err {jnp.max(jnp.abs(out - ref))}")

    # --- K-tiled fallback path (auto-selected for huge weights; forced here to validate) ---
    in2, batch2 = 256, 24                            # odd batch exercises row padding
    x2 = jax.random.normal(kx, (batch2, in2), dtype=jnp.float32)
    w1b = jax.random.normal(kw1, (in2, hidden_size), dtype=jnp.float32) * 0.05
    params2 = prepare_params(w1b, b1, w2, b2, force_k_tiling=True)
    out2 = jax.block_until_ready(neural_net_forward(x2, params2))
    ref2 = jnp.maximum(x2 @ w1b + b1, 0.0) @ w2 + b2
    assert out2.shape == (batch2, num_classes)
    assert jnp.allclose(out2, ref2, atol=5e-2, rtol=5e-2), (
        f"k-tiled-path max abs err {jnp.max(jnp.abs(out2 - ref2))}")

    print("KERNEL_OK")
</pallas_src>

<mosaic_0001>
module attributes {stable_mosaic.version = 11 : i64} {
  func.func @mlp_kernel(%arg0: i32, %arg1: memref<32x64xf32, #tpu.memory_space<vmem>>, %arg2: memref<64x128xbf16, #tpu.memory_space<vmem>>, %arg3: memref<1x128xf32, #tpu.memory_space<vmem>>, %arg4: memref<128x128xbf16, #tpu.memory_space<vmem>>, %arg5: memref<1x128xf32, #tpu.memory_space<vmem>>, %arg6: memref<32x128xf32, #tpu.memory_space<vmem>>) attributes {dimension_semantics = [#tpu.dimension_semantics<parallel>], iteration_bounds = array<i64: 2>, scalar_prefetch = 0 : i64, scratch_operands = 0 : i64, tpu.core_type = #tpu.core_type<tc>, window_params = [{transform_indices = @transform_0, window_bounds = array<i64: 32, 64>}, {pipeline_mode = #tpu.pipeline_mode<synchronous>, transform_indices = @transform_1, window_bounds = array<i64: 64, 128>}, {pipeline_mode = #tpu.pipeline_mode<synchronous>, transform_indices = @transform_2, window_bounds = array<i64: 1, 128>}, {pipeline_mode = #tpu.pipeline_mode<synchronous>, transform_indices = @transform_3, window_bounds = array<i64: 128, 128>}, {pipeline_mode = #tpu.pipeline_mode<synchronous>, transform_indices = @transform_4, window_bounds = array<i64: 1, 128>}, {transform_indices = @transform_5, window_bounds = array<i64: 32, 128>}]} {
    %c0 = arith.constant 0 : index
    %c0_0 = arith.constant 0 : index
    %0 = vector.load %arg1[%c0, %c0_0] : memref<32x64xf32, #tpu.memory_space<vmem>>, vector<32x64xf32>
    %1 = arith.truncf %0 : vector<32x64xf32> to vector<32x64xbf16>
    %c0_1 = arith.constant 0 : index
    %c0_2 = arith.constant 0 : index
    %2 = vector.load %arg2[%c0_1, %c0_2] : memref<64x128xbf16, #tpu.memory_space<vmem>>, vector<64x128xbf16>
    %cst = arith.constant dense<0.000000e+00> : vector<32x128xf32>
    %3 = tpu.matmul %1, %2, %cst {dimension_numbers = #tpu.dot_dimension_numbers<[1], [0], [0], [1], [0, 0, 1, 1], [], []>} : vector<32x64xbf16>, vector<64x128xbf16>, vector<32x128xf32> -> vector<32x128xf32>
    %c0_3 = arith.constant 0 : index
    %c0_4 = arith.constant 0 : index
    %4 = vector.load %arg3[%c0_3, %c0_4] : memref<1x128xf32, #tpu.memory_space<vmem>>, vector<1x128xf32>
    %5 = vector.broadcast %4 : vector<1x128xf32> to vector<32x128xf32>
    %6 = arith.addf %3, %5 : vector<32x128xf32>
    %cst_5 = arith.constant 0.000000e+00 : f32
    %7 = vector.broadcast %cst_5 : f32 to vector<32x128xf32>
    %8 = arith.maximumf %6, %7 : vector<32x128xf32>
    %9 = arith.truncf %8 : vector<32x128xf32> to vector<32x128xbf16>
    %c0_6 = arith.constant 0 : index
    %c0_7 = arith.constant 0 : index
    %10 = vector.load %arg4[%c0_6, %c0_7] : memref<128x128xbf16, #tpu.memory_space<vmem>>, vector<128x128xbf16>
    %cst_8 = arith.constant dense<0.000000e+00> : vector<32x128xf32>
    %11 = tpu.matmul %9, %10, %cst_8 {dimension_numbers = #tpu.dot_dimension_numbers<[1], [0], [0], [1], [0, 0, 1, 1], [], []>} : vector<32x128xbf16>, vector<128x128xbf16>, vector<32x128xf32> -> vector<32x128xf32>
    %c0_9 = arith.constant 0 : index
    %c0_10 = arith.constant 0 : index
    %12 = vector.load %arg5[%c0_9, %c0_10] : memref<1x128xf32, #tpu.memory_space<vmem>>, vector<1x128xf32>
    %13 = vector.broadcast %12 : vector<1x128xf32> to vector<32x128xf32>
    %14 = arith.addf %11, %13 : vector<32x128xf32>
    %c0_11 = arith.constant 0 : index
    %c0_12 = arith.constant 0 : index
    %15 = vector.load %arg6[%c0_11, %c0_12] : memref<32x128xf32, #tpu.memory_space<vmem>>, vector<32x128xf32>
    tpu.vector_store %arg6[%c0_11, %c0_12], %14 {strides = array<i32>} : memref<32x128xf32, #tpu.memory_space<vmem>>, vector<32x128xf32>,
    return
  }
  func.func @transform_0(%arg0: i32) -> (i32, i32) {
    %c0_i32 = arith.constant 0 : i32
    %c0_i32_0 = arith.constant 0 : i32
    return %arg0, %c0_i32 : i32, i32
  }
  func.func @transform_1(%arg0: i32) -> (i32, i32) {
    %c0_i32 = arith.constant 0 : i32
    %c0_i32_0 = arith.constant 0 : i32
    %c0_i32_1 = arith.constant 0 : i32
    return %c0_i32, %c0_i32_0 : i32, i32
  }
  func.func @transform_2(%arg0: i32) -> (i32, i32) {
    %c0_i32 = arith.constant 0 : i32
    %c0_i32_0 = arith.constant 0 : i32
    %c0_i32_1 = arith.constant 0 : i32
    return %c0_i32, %c0_i32_0 : i32, i32
  }
  func.func @transform_3(%arg0: i32) -> (i32, i32) {
    %c0_i32 = arith.constant 0 : i32
    %c0_i32_0 = arith.constant 0 : i32
    %c0_i32_1 = arith.constant 0 : i32
    return %c0_i32, %c0_i32_0 : i32, i32
  }
  func.func @transform_4(%arg0: i32) -> (i32, i32) {
    %c0_i32 = arith.constant 0 : i32
    %c0_i32_0 = arith.constant 0 : i32
    %c0_i32_1 = arith.constant 0 : i32
    return %c0_i32, %c0_i32_0 : i32, i32
  }
  func.func @transform_5(%arg0: i32) -> (i32, i32) {
    %c0_i32 = arith.constant 0 : i32
    %c0_i32_0 = arith.constant 0 : i32
    return %arg0, %c0_i32 : i32, i32
  }
}

</mosaic_0001>

<llo_original>
// kernel: tpu_custom_call.1
$region0: #{tpu_custom_call.1}
  #allocation0 [shape = 'u32[]', space=smem, size = 0x4, offset = 0x4, fixed_abs, tag = 'smem constant byte address 0x4 - core index']
  #allocation1 [shape = 'u32[144,128]{1,0:T(1,128)}', space=vmem, size = 0x12000, scoped, tag = 'internal scratch']
  %s0 = inlined_call_operand.hbm [shape: f32[64,64], index: 0, kind: input, shape index: {}]
  %s1 = inlined_call_operand.hbm [shape: bf16[64,128], index: 1, kind: input, shape index: {}]
  %s2 = inlined_call_operand.vmem [shape: f32[1,128], index: 2, kind: input, shape index: {}]
  %s3 = inlined_call_operand.hbm [shape: bf16[128,128], index: 3, kind: input, shape index: {}]
  %s4 = inlined_call_operand.vmem [shape: f32[1,128], index: 4, kind: input, shape index: {}]
  %s5 = inlined_call_operand.hbm [shape: f32[64,128], index: 5, kind: output, shape index: {}]
  %s6 = sld [smem:[#allocation0]]
  $region65: #{tpu_custom_call.1} parent=0
    _
  %s8 = ssub.s32 1, %s6
  %s9 = scalar_select 0, %s8, %s6
  $region1: #{tpu_custom_call.1} parent=0
    #allocation2 [shape = 'u8[32768]{0}', space=vmem, size = 0x8000, scoped, tag = 'input window, operand 0']
    #allocation3 [shape = 's32[2]{0}', space=sflag, size = 0x8, scoped, tag = 'scoped memory for tpu_custom_call.1']
    #allocation4 [shape = 's32[2]{0}', space=sflag, size = 0x8, scoped, tag = 'scoped memory for tpu_custom_call.1']
    #allocation5 [shape = 'u8[16384]{0}', space=vmem, size = 0x4000, scoped, tag = 'input window, operand 1, single buffered']
    #allocation6 [shape = 's32[1]{0}', space=sflag, size = 0x4, scoped, tag = 'scoped memory for tpu_custom_call.1']
    #allocation7 [shape = 'u8[32768]{0}', space=vmem, size = 0x8000, scoped, tag = 'input window, operand 3, single buffered']
    #allocation8 [shape = 'u8[32768]{0}', space=vmem, size = 0x8000, scoped, tag = 'output window, operand 0']
    %10 = vsyncpa [#allocation3], 0
    %s11 = scalar_lea.sflag [#allocation3], 1
    %12 = vsyncpa %s11, 0
    %13 = vsyncpa [#allocation6], 0
    %14 = vsyncpa [#allocation4], 0
    %s15 = scalar_lea.sflag [#allocation4], 1
    %16 = vsyncpa %s15, 0
    loop: start=0, step=1, limit=4
    $region2: #{tpu_custom_call.1} parent=1 // loop_pre_header
      _
    $region3: #{tpu_custom_call.1} parent=1 // loop_header
      %s18 = sphi 0, %s22
      %p19 = scmp.ge.s32.totalorder %s18, 4
      %s28 = sphi 0, %s30
      %s31 = sphi 0, %s28
      %s32 = sphi 0, %s31
      %s48 = sphi 0, %s32
      %s52 = sphi 0, %s52
      %s54 = sphi 0, %s52
      %s55 = sphi 0, %s54
      %s69 = sphi 0, %s55
      %s73 = sphi 0, %s73
      %s75 = sphi 0, %s73
      %s76 = sphi 0, %s75
      %s90 = sphi 0, %s76
      %s94 = sphi 0, %s94
      %s96 = sphi 0, %s94
      %s97 = sphi 0, %s96
      %s111 = sphi 0, %s97
      %s115 = sphi 0, %s115
      %s117 = sphi 0, %s115
      %s118 = sphi 0, %s117
      %s132 = sphi 0, %s118
      %s138 = sphi 0, %s140
      %s141 = sphi 0, %s138
      %s142 = sphi 0, %s141
      %s158 = sphi 0, %s142
    $region4: #{tpu_custom_call.1} parent=1 // loop_header_branch
      %21 = sbr.rel (%p19) target = $region8
    $region5: #{tpu_custom_call.1} parent=1 // loop_body
      %s23 = ssub.s32 %s18, 1
      %s24 = ssub.s32 %s18, 2
      %s25 = sadd.s32 %s18, 1
      %s26 = ssub.s32 %s18, %s25
      %p27 = scmp.eq.s32.totalorder %s26, 0
      %s29 = sadd.s32 %s28, 1
      %s30 = scalar_select %p27, %s28, %s29
      %p33 = pneg %p27
      %p34 = scmp.eq.s32.totalorder %s18, 1
      %p35 = por %p33, %p34
      %p36 = scmp.ne.s32.totalorder %s28, %s31
      %p37 = scmp.eq.s32.totalorder %s18, 0
      %p38 = por %p36, %p37
      %p39 = scmp.ne.s32.totalorder %s28, %s31
      %p40 = scmp.eq.s32.totalorder %s23, 1
      %p41 = por %p39, %p40
      %p42 = scmp.ne.s32.totalorder %s31, %s32
      %p43 = scmp.eq.s32.totalorder %s23, 0
      %p44 = por %p42, %p43
      %p45 = scmp.ne.s32.totalorder %s31, %s32
      %p46 = scmp.eq.s32.totalorder %s24, 1
      %p47 = por %p45, %p46
      %p49 = scmp.ne.s32.totalorder %s32, %s48
      %p50 = scmp.eq.s32.totalorder %s24, 0
      %p51 = por %p49, %p50
      %s53 = sadd.s32 %s52, 1
      %p56 = scmp.eq.s32.totalorder %s18, 1
      %p57 = scmp.ne.s32.totalorder %s52, %s54
      %p58 = scmp.eq.s32.totalorder %s18, 0
      %p59 = por %p57, %p58
      %p60 = scmp.ne.s32.totalorder %s52, %s54
      %p61 = scmp.eq.s32.totalorder %s23, 1
      %p62 = por %p60, %p61
      %p63 = scmp.ne.s32.totalorder %s54, %s55
      %p64 = scmp.eq.s32.totalorder %s23, 0
      %p65 = por %p63, %p64
      %p66 = scmp.ne.s32.totalorder %s54, %s55
      %p67 = scmp.eq.s32.totalorder %s24, 1
      %p68 = por %p66, %p67
      %p70 = scmp.ne.s32.totalorder %s55, %s69
      %p71 = scmp.eq.s32.totalorder %s24, 0
      %p72 = por %p70, %p71
      %s74 = sadd.s32 %s73, 1
      %p77 = scmp.eq.s32.totalorder %s18, 1
      %p78 = scmp.ne.s32.totalorder %s73, %s75
      %p79 = scmp.eq.s32.totalorder %s18, 0
      %p80 = por %p78, %p79
      %p81 = scmp.ne.s32.totalorder %s73, %s75
      %p82 = scmp.eq.s32.totalorder %s23, 1
      %p83 = por %p81, %p82
      %p84 = scmp.ne.s32.totalorder %s75, %s76
      %p85 = scmp.eq.s32.totalorder %s23, 0
      %p86 = por %p84, %p85
      %p87 = scmp.ne.s32.totalorder %s75, %s76
      %p88 = scmp.eq.s32.totalorder %s24, 1
      %p89 = por %p87, %p88
      %p91 = scmp.ne.s32.totalorder %s76, %s90
      %p92 = scmp.eq.s32.totalorder %s24, 0
      %p93 = por %p91, %p92
      %s95 = sadd.s32 %s94, 1
      %p98 = scmp.eq.s32.totalorder %s18, 1
      %p99 = scmp.ne.s32.totalorder %s94, %s96
      %p100 = scmp.eq.s32.totalorder %s18, 0
      %p101 = por %p99, %p100
      %p102 = scmp.ne.s32.totalorder %s94, %s96
      %p103 = scmp.eq.s32.totalorder %s23, 1
      %p104 = por %p102, %p103
      %p105 = scmp.ne.s32.totalorder %s96, %s97
      %p106 = scmp.eq.s32.totalorder %s23, 0
      %p107 = por %p105, %p106
      %p108 = scmp.ne.s32.totalorder %s96, %s97
      %p109 = scmp.eq.s32.totalorder %s24, 1
      %p110 = por %p108, %p109
      %p112 = scmp.ne.s32.totalorder %s97, %s111
      %p113 = scmp.eq.s32.totalorder %s24, 0
      %p114 = por %p112, %p113
      %s116 = sadd.s32 %s115, 1
      %p119 = scmp.eq.s32.totalorder %s18, 1
      %p120 = scmp.ne.s32.totalorder %s115, %s117
      %p121 = scmp.eq.s32.totalorder %s18, 0
      %p122 = por %p120, %p121
      %p123 = scmp.ne.s32.totalorder %s115, %s117
      %p124 = scmp.eq.s32.totalorder %s23, 1
      %p125 = por %p123, %p124
      %p126 = scmp.ne.s32.totalorder %s117, %s118
      %p127 = scmp.eq.s32.totalorder %s23, 0
      %p128 = por %p126, %p127
      %p129 = scmp.ne.s32.totalorder %s117, %s118
      %p130 = scmp.eq.s32.totalorder %s24, 1
      %p131 = por %p129, %p130
      %p133 = scmp.ne.s32.totalorder %s118, %s132
      %p134 = scmp.eq.s32.totalorder %s24, 0
      %p135 = por %p133, %p134
      %s136 = ssub.s32 %s18, %s25
      %p137 = scmp.eq.s32.totalorder %s136, 0
      %s139 = sadd.s32 %s138, 1
      %s140 = scalar_select %p137, %s138, %s139
      %p143 = pneg %p137
      %p144 = scmp.eq.s32.totalorder %s18, 1
      %p145 = por %p143, %p144
      %p146 = scmp.ne.s32.totalorder %s138, %s141
      %p147 = scmp.eq.s32.totalorder %s18, 0
      %p148 = por %p146, %p147
      %p149 = scmp.ne.s32.totalorder %s138, %s141
      %p150 = scmp.eq.s32.totalorder %s23, 1
      %p151 = por %p149, %p150
      %p152 = scmp.ne.s32.totalorder %s141, %s142
      %p153 = scmp.eq.s32.totalorder %s23, 0
      %p154 = por %p152, %p153
      %p155 = scmp.ne.s32.totalorder %s141, %s142
      %p156 = scmp.eq.s32.totalorder %s24, 1
      %p157 = por %p155, %p156
      %p159 = scmp.ne.s32.totalorder %s142, %s158
      %p160 = scmp.eq.s32.totalorder %s24, 0
      %p161 = por %p159, %p160
      %p162 = scmp.le.s32.totalorder 1, %s18
      %p163 = scmp.lt.s32.totalorder %s18, 3
      %p164 = pnand %p162, %p163
      %p165 = pneg %p164
      // Predicated region
      $region9: #{tpu_custom_call.1} parent=5 // pred_check
        _
      $region10: #{tpu_custom_call.1} parent=5 // pred_check_branch
        %167 = sbr.rel (%p164) target = $region12
      $region11: #{tpu_custom_call.1} parent=5 // pred_region
        %s168 = ssub.s32 %s18, 1
        // Predicated region
        $region13: #{tpu_custom_call.1} parent=11 // pred_check
          %p169 = pneg %p65
        $region14: #{tpu_custom_call.1} parent=11 // pred_check_branch
          %171 = sbr.rel (%p169) target = $region16
        $region15: #{tpu_custom_call.1} parent=11 // pred_region
          %s173 = ssub.s32 512, 512
          %174 = vsyncadd [#allocation6], %s173
          %s175 = sshll.u32 [#allocation5], 4
          %s176 = int_to_ptr.vmem [resolvable:$true] %s175
          %181 = dma.hbm_to_vmem [thread:$0]  %s1, 512, %s176, [#allocation6], 64, 64, 4
        $region16: #{tpu_custom_call.1} parent=11 // pred_fallthru
          _
        // Predicated region
        $region17: #{tpu_custom_call.1} parent=11 // pred_check
          %p182 = pneg %p86
        $region18: #{tpu_custom_call.1} parent=11 // pred_check_branch
          %184 = sbr.rel (%p182) target = $region20
        $region19: #{tpu_custom_call.1} parent=11 // pred_region
          _
        $region20: #{tpu_custom_call.1} parent=11 // pred_fallthru
          _
        // Predicated region
        $region21: #{tpu_custom_call.1} parent=11 // pred_check
          %p185 = pneg %p107
        $region22: #{tpu_custom_call.1} parent=11 // pred_check_branch
          %187 = sbr.rel (%p185) target = $region24
        $region23: #{tpu_custom_call.1} parent=11 // pred_region
          %s189 = ssub.s32 1024, 1024
          %190 = vsyncadd [#allocation6], %s189
          %s191 = sshll.u32 [#allocation7], 4
          %s192 = int_to_ptr.vmem [resolvable:$true] %s191
          %197 = dma.hbm_to_vmem [thread:$0]  %s3, 1024, %s192, [#allocation6], 64, 64, 4
        $region24: #{tpu_custom_call.1} parent=11 // pred_fallthru
          _
        // Predicated region
        $region25: #{tpu_custom_call.1} parent=11 // pred_check
          %p198 = pneg %p128
        $region26: #{tpu_custom_call.1} parent=11 // pred_check_branch
          %200 = sbr.rel (%p198) target = $region28
        $region27: #{tpu_custom_call.1} parent=11 // pred_region
          _
        $region28: #{tpu_custom_call.1} parent=11 // pred_fallthru
          _
      $region12: #{tpu_custom_call.1} parent=5 // pred_fallthru
        _
      %p201 = scmp.lt.s32.totalorder %s18, 2
      // Predicated region
      $region29: #{tpu_custom_call.1} parent=5 // pred_check
        %p202 = pneg %p201
      $region30: #{tpu_custom_call.1} parent=5 // pred_check_branch
        %204 = sbr.rel (%p202) target = $region32
      $region31: #{tpu_custom_call.1} parent=5 // pred_region
        // Predicated region
        $region33: #{tpu_custom_call.1} parent=31 // pred_check
          %p205 = pneg %p38
        $region34: #{tpu_custom_call.1} parent=31 // pred_check_branch
          %207 = sbr.rel (%p205) target = $region36
        $region35: #{tpu_custom_call.1} parent=31 // pred_region
          %s208 = sand.u32 %s28, 1
          %s209 = scalar_lea.sflag [#allocation3], %s208
          %s210 = sand.u32 %s28, 1
          %s211 = smul.addr %s210, 32
          %s212 = scalar_lea.vmem [#allocation2], %s211
          %s213 = smul.u32 4, %s18
          %s215 = ssub.s32 512, 512
          %216 = vsyncadd %s209, %s215
          %s217 = smul.addr %s213, 128
          %s218 = scalar_lea.hbm %s0, %s217
          %s219 = sshll.u32 %s212, 4
          %s220 = int_to_ptr.vmem [resolvable:$true] %s219
          %225 = dma.hbm_to_vmem [thread:$0]  %s218, 512, %s220, %s209, 128, 128, 8
        $region36: #{tpu_custom_call.1} parent=31 // pred_fallthru
          _
      $region32: #{tpu_custom_call.1} parent=5 // pred_fallthru
        _
      %p226 = scmp.le.s32.totalorder 1, %s18
      %p227 = scmp.lt.s32.totalorder %s18, 3
      %p228 = pnand %p226, %p227
      %p229 = pneg %p228
      // Predicated region
      $region37: #{tpu_custom_call.1} parent=5 // pred_check
        _
      $region38: #{tpu_custom_call.1} parent=5 // pred_check_branch
        %231 = sbr.rel (%p228) target = $region40
      $region39: #{tpu_custom_call.1} parent=5 // pred_region
        %s232 = ssub.s32 %s18, 1
        %s233 = sand.u32 %s31, 1
        %s234 = scalar_lea.sflag [#allocation3], %s233
        %s235 = sand.u32 %s31, 1
        %s236 = smul.addr %s235, 32
        %s237 = scalar_lea.vmem [#allocation2], %s236
        // Predicated region
        $region41: #{tpu_custom_call.1} parent=39 // pred_check
          %p238 = pneg %p44
        $region42: #{tpu_custom_call.1} parent=39 // pred_check_branch
          %240 = sbr.rel (%p238) target = $region44
        $region43: #{tpu_custom_call.1} parent=39 // pred_region
          %241 = dma.done %s234, 512
        $region44: #{tpu_custom_call.1} parent=39 // pred_fallthru
          _
        // Predicated region
        $region45: #{tpu_custom_call.1} parent=39 // pred_check
          %p242 = pneg %p65
        $region46: #{tpu_custom_call.1} parent=39 // pred_check_branch
          %244 = sbr.rel (%p242) target = $region48
        $region47: #{tpu_custom_call.1} parent=39 // pred_region
          %245 = dma.done [#allocation6], 512
        $region48: #{tpu_custom_call.1} parent=39 // pred_fallthru
          _
        // Predicated region
        $region49: #{tpu_custom_call.1} parent=39 // pred_check
          %p246 = pneg %p107
        $region50: #{tpu_custom_call.1} parent=39 // pred_check_branch
          %248 = sbr.rel (%p246) target = $region52
        $region51: #{tpu_custom_call.1} parent=39 // pred_region
          %249 = dma.done [#allocation6], 1024
        $region52: #{tpu_custom_call.1} parent=39 // pred_fallthru
          _
        %s250 = sand.u32 %s31, 1
        %s251 = scalar_lea.sflag [#allocation3], %s250
        %s252 = sand.u32 %s31, 1
        %s253 = smul.addr %s252, 32
        %s254 = scalar_lea.vmem [#allocation2], %s253
        %p255 = pneg %p44
        %p256 = pneg %p41
        %p257 = pneg %p65
        %p258 = pneg %p62
        %p259 = pneg %p86
        %p260 = pneg %p83
        %p261 = pneg %p107
        %p262 = pneg %p104
        %p263 = pneg %p128
        %p264 = pneg %p125
        %p265 = pneg %p154
        %p266 = pneg %p151
        %s267 = sand.u32 %s141, 1
        %s268 = scalar_lea.sflag [#allocation4], %s267
        %s269 = sand.u32 %s141, 1
        %s270 = smul.addr %s269, 32
        %s271 = scalar_lea.vmem [#allocation8], %s270
        %s272 = smul.u32 4, %s23
        %s273 = smul.u32 4, %s23
        %v275 = vld [vmem:[%s237] sm:$0xff]
        %v276 = vld [vmem:[%s237 + $0x8] sm:$0xff]
        %v277 = vld [vmem:[%s237 + $0x10] sm:$0xff]
        %v278 = vld [vmem:[%s237 + $0x18] sm:$0xff]
        %v279 = vpack.c.bf16 %v276, %v275
        %v280 = vpack.c.bf16 %v278, %v277
        %v281 = vld [vmem:[#allocation5] sm:$0xf]
        %v282 = vld [vmem:[#allocation5 + $0x4] sm:$0xf]
        %v283 = vld [vmem:[#allocation5 + $0x8] sm:$0xf]
        %v284 = vld [vmem:[#allocation5 + $0xc] sm:$0xf]
        %v285 = vld [vmem:[#allocation5 + $0x10] sm:$0xf]
        %v286 = vld [vmem:[#allocation5 + $0x14] sm:$0xf]
        %v287 = vld [vmem:[#allocation5 + $0x18] sm:$0xf]
        %v288 = vld [vmem:[#allocation5 + $0x1c] sm:$0xf]
        %v289 = vld [vmem:[%s2] sm:$0x1]
        %v291 = vlaneseq
        %v292 = vshrl.u32 %v291, 7
        %v293 = vsub.s32 0, %v292
        %v294 = vrot.slane %v289, %v293
        %v304 = vunpack.c.l.b16 %v281
        %v305 = vunpack.c.l.b16 %v282
        %v306 = vunpack.c.l.b16 %v283
        %v307 = vunpack.c.l.b16 %v284
        %v308 = vunpack.c.l.b16 %v285
        %v309 = vunpack.c.l.b16 %v286
        %v310 = vunpack.c.l.b16 %v287
        %v311 = vunpack.c.l.b16 %v288
        %v312 = vpack.c.b16 %v305, %v304
        %v313 = vpack.c.b16 %v307, %v306
        %v314 = vpack.c.b16 %v309, %v308
        %v315 = vpack.c.b16 %v311, %v310
        %vm320 = vcmask 523264
        %v322 = vsel %vm320, %v279, 0
        %v325 = vsel %vm320, %v280, 0
        %327 = vmatprep.subr.bf16.mxu0 0
        %328 = vmatpush1.bf16.msra.mxu0 %v312
        %329 = vmatprep.subr.bf16.mxu0 0
        %330 = vmatpush1.bf16.msra.mxu0 %v313
        %331 = vmatprep.subr.bf16.mxu0 0
        %332 = vmatpush1.bf16.msra.mxu0 %v314
        %333 = vmatprep.subr.bf16.mxu0 0
        %334 = vmatpush1.bf16.msra.mxu0 %v315
        %335 = vmatprep.subr.bf16.mxu0 0
        %336 = vmatpush1.bf16.msra.mxu0 0
        %337 = vmatprep.subr.bf16.mxu0 0
        %338 = vmatpush1.bf16.msra.mxu0 0
        %339 = vmatprep.subr.bf16.mxu0 0
        %340 = vmatpush1.bf16.msra.mxu0 0
        %341 = vmatprep.subr.bf16.mxu0 0
        %342 = vmatpush1.bf16.msra.mxu0 0
        %343 = vmatprep.subr.bf16.mxu0 0
        %344 = vmatpush1.bf16.msra.mxu0 0
        %345 = vmatprep.subr.bf16.mxu0 0
        %346 = vmatpush1.bf16.msra.mxu0 0
        %347 = vmatprep.subr.bf16.mxu0 0
        %348 = vmatpush1.bf16.msra.mxu0 0
        %349 = vmatprep.subr.bf16.mxu0 0
        %350 = vmatpush1.bf16.msra.mxu0 0
        %351 = vmatprep.subr.bf16.mxu0 0
        %352 = vmatpush1.bf16.msra.mxu0 0
        %353 = vmatprep.subr.bf16.mxu0 0
        %354 = vmatpush1.bf16.msra.mxu0 0
        %355 = vmatprep.subr.bf16.mxu0 0
        %356 = vmatpush1.bf16.msra.mxu0 0
        %357 = vmatprep.subr.bf16.mxu0 0
        %358 = vmatpush1.bf16.msra.mxu0 0
        %359 = vmatprep.mubr.bf16.mxu0 0
        %360 = vmatmul.mubr.bf16.gmra.mrb[0].mxu0 %v322
        %v361 = vpop.f32.mrb[0].mxu0
        %v362 = vadd.f32 %v294, %v361
        %v363 = vpop.f32.mrb[0].mxu0
        %v364 = vpop.f32.mrb[0].mxu0
        %v365 = vadd.f32 %v294, %v364
        %v366 = vpop.f32.mrb[0].mxu0
        %367 = vmatprep.mubr.bf16.mxu0 0
        %368 = vmatmul.mubr.bf16.gmra.mrb[0].mxu0 %v325
        %v369 = vpop.f32.mrb[0].mxu0
        %v370 = vadd.f32 %v294, %v369
        %v371 = vpop.f32.mrb[0].mxu0
        %v372 = vpop.f32.mrb[0].mxu0
        %v373 = vadd.f32 %v294, %v372
        %v374 = vpop.f32.mrb[0].mxu0
        %375 = vdwg.mxu0
        %v376 = vmax.f32 %v362, 0.0
        %v377 = vmax.f32 %v365, 0.0
        %v378 = vmax.f32 %v370, 0.0
        %v379 = vmax.f32 %v373, 0.0
        %v380 = vpack.c.bf16 %v377, %v376
        %v381 = vpack.c.bf16 %v379, %v378
        %v382 = vld [vmem:[#allocation7] sm:$0xf]
        %v383 = vld [vmem:[#allocation7 + $0x4] sm:$0xf]
        %v384 = vld [vmem:[#allocation7 + $0x8] sm:$0xf]
        %v385 = vld [vmem:[#allocation7 + $0xc] sm:$0xf]
        %v386 = vld [vmem:[#allocation7 + $0x10] sm:$0xf]
        %v387 = vld [vmem:[#allocation7 + $0x14] sm:$0xf]
        %v388 = vld [vmem:[#allocation7 + $0x18] sm:$0xf]
        %v389 = vld [vmem:[#allocation7 + $0x1c] sm:$0xf]
        %v390 = vld [vmem:[#allocation7 + $0x20] sm:$0xf]
        %v391 = vld [vmem:[#allocation7 + $0x24] sm:$0xf]
        %v392 = vld [vmem:[#allocation7 + $0x28] sm:$0xf]
        %v393 = vld [vmem:[#allocation7 + $0x2c] sm:$0xf]
        %v394 = vld [vmem:[#allocation7 + $0x30] sm:$0xf]
        %v395 = vld [vmem:[#allocation7 + $0x34] sm:$0xf]
        %v396 = vld [vmem:[#allocation7 + $0x38] sm:$0xf]
        %v397 = vld [vmem:[#allocation7 + $0x3c] sm:$0xf]
        %v398 = vld [vmem:[%s4] sm:$0x1]
        %v400 = vlaneseq
        %v401 = vshrl.u32 %v400, 7
        %v402 = vsub.s32 0, %v401
        %v403 = vrot.slane %v398, %v402
        %v421 = vunpack.c.l.b16 %v382
        %v422 = vunpack.c.l.b16 %v383
        %v423 = vunpack.c.l.b16 %v384
        %v424 = vunpack.c.l.b16 %v385
        %v425 = vunpack.c.l.b16 %v386
        %v426 = vunpack.c.l.b16 %v387
        %v427 = vunpack.c.l.b16 %v388
        %v428 = vunpack.c.l.b16 %v389
        %v429 = vunpack.c.l.b16 %v390
        %v430 = vunpack.c.l.b16 %v391
        %v431 = vunpack.c.l.b16 %v392
        %v432 = vunpack.c.l.b16 %v393
        %v433 = vunpack.c.l.b16 %v394
        %v434 = vunpack.c.l.b16 %v395
        %v435 = vunpack.c.l.b16 %v396
        %v436 = vunpack.c.l.b16 %v397
        %v437 = vpack.c.b16 %v422, %v421
        %v438 = vpack.c.b16 %v424, %v423
        %v439 = vpack.c.b16 %v426, %v425
        %v440 = vpack.c.b16 %v428, %v427
        %v441 = vpack.c.b16 %v430, %v429
        %v442 = vpack.c.b16 %v432, %v431
        %v443 = vpack.c.b16 %v434, %v433
        %v444 = vpack.c.b16 %v436, %v435
        %453 = vmatprep.subr.bf16.mxu0 0
        %454 = vmatpush1.bf16.msra.mxu0 %v437
        %455 = vmatprep.subr.bf16.mxu0 0
        %456 = vmatpush1.bf16.msra.mxu0 %v438
        %457 = vmatprep.subr.bf16.mxu0 0
        %458 = vmatpush1.bf16.msra.mxu0 %v439
        %459 = vmatprep.subr.bf16.mxu0 0
        %460 = vmatpush1.bf16.msra.mxu0 %v440
        %461 = vmatprep.subr.bf16.mxu0 0
        %462 = vmatpush1.bf16.msra.mxu0 %v441
        %463 = vmatprep.subr.bf16.mxu0 0
        %464 = vmatpush1.bf16.msra.mxu0 %v442
        %465 = vmatprep.subr.bf16.mxu0 0
        %466 = vmatpush1.bf16.msra.mxu0 %v443
        %467 = vmatprep.subr.bf16.mxu0 0
        %468 = vmatpush1.bf16.msra.mxu0 %v444
        %469 = vmatprep.subr.bf16.mxu0 0
        %470 = vmatpush1.bf16.msra.mxu0 0
        %471 = vmatprep.subr.bf16.mxu0 0
        %472 = vmatpush1.bf16.msra.mxu0 0
        %473 = vmatprep.subr.bf16.mxu0 0
        %474 = vmatpush1.bf16.msra.mxu0 0
        %475 = vmatprep.subr.bf16.mxu0 0
        %476 = vmatpush1.bf16.msra.mxu0 0
        %477 = vmatprep.subr.bf16.mxu0 0
        %478 = vmatpush1.bf16.msra.mxu0 0
        %479 = vmatprep.subr.bf16.mxu0 0
        %480 = vmatpush1.bf16.msra.mxu0 0
        %481 = vmatprep.subr.bf16.mxu0 0
        %482 = vmatpush1.bf16.msra.mxu0 0
        %483 = vmatprep.subr.bf16.mxu0 0
        %484 = vmatpush1.bf16.msra.mxu0 0
        %485 = vmatprep.mubr.bf16.mxu0 0
        %486 = vmatmul.mubr.bf16.gmra.mrb[0].mxu0 %v380
        %v487 = vpop.f32.mrb[0].mxu0
        %v488 = vadd.f32 %v403, %v487
        %v489 = vpop.f32.mrb[0].mxu0
        %v490 = vpop.f32.mrb[0].mxu0
        %v491 = vadd.f32 %v403, %v490
        %v492 = vpop.f32.mrb[0].mxu0
        %493 = vmatprep.mubr.bf16.mxu0 0
        %494 = vmatmul.mubr.bf16.gmra.mrb[0].mxu0 %v381
        %v495 = vpop.f32.mrb[0].mxu0
        %v496 = vadd.f32 %v403, %v495
        %v497 = vpop.f32.mrb[0].mxu0
        %v498 = vpop.f32.mrb[0].mxu0
        %v499 = vadd.f32 %v403, %v498
        %v500 = vpop.f32.mrb[0].mxu0
        %501 = vdwg.mxu0
        %502 = vst [vmem:[%s271] sm:$0xff] %v488
        %503 = vst [vmem:[%s271 + $0x8] sm:$0xff] %v491
        %504 = vst [vmem:[%s271 + $0x10] sm:$0xff] %v496
        %505 = vst [vmem:[%s271 + $0x18] sm:$0xff] %v499
        %s506 = sand.u32 %s141, 1
        %s507 = scalar_lea.sflag [#allocation4], %s506
        %s508 = sand.u32 %s141, 1
        %s509 = smul.addr %s508, 32
        %s510 = scalar_lea.vmem [#allocation8], %s509
        // Predicated region
        $region53: #{tpu_custom_call.1} parent=39 // pred_check
          %p511 = pneg %p151
        $region54: #{tpu_custom_call.1} parent=39 // pred_check_branch
          %513 = sbr.rel (%p511) target = $region56
        $region55: #{tpu_custom_call.1} parent=39 // pred_region
          %s514 = smul.u32 4, %s23
          %s516 = ssub.s32 512, 512
          %517 = vsyncadd %s507, %s516
          %s518 = smul.addr %s514, 128
          %s519 = scalar_lea.hbm %s5, %s518
          %s520 = sshll.u32 %s510, 4
          %s521 = int_to_ptr.vmem [resolvable:$true] %s520
          %526 = dma.vmem_to_hbm [thread:$0]  %s521, 512, %s519, %s507, 128, 128, 8
        $region56: #{tpu_custom_call.1} parent=39 // pred_fallthru
          _
      $region40: #{tpu_custom_call.1} parent=5 // pred_fallthru
        _
      %p527 = scmp.le.s32.totalorder 2, %s18
      // Predicated region
      $region57: #{tpu_custom_call.1} parent=5 // pred_check
        %p528 = pneg %p527
      $region58: #{tpu_custom_call.1} parent=5 // pred_check_branch
        %530 = sbr.rel (%p528) target = $region60
      $region59: #{tpu_custom_call.1} parent=5 // pred_region
        %s531 = ssub.s32 %s18, 2
        // Predicated region
        $region61: #{tpu_custom_call.1} parent=59 // pred_check
          %p532 = pneg %p157
        $region62: #{tpu_custom_call.1} parent=59 // pred_check_branch
          %534 = sbr.rel (%p532) target = $region64
        $region63: #{tpu_custom_call.1} parent=59 // pred_region
          %s535 = sand.u32 %s142, 1
          %s536 = scalar_lea.sflag [#allocation4], %s535
          %s537 = sand.u32 %s142, 1
          %s538 = smul.addr %s537, 32
          %s539 = scalar_lea.vmem [#allocation8], %s538
          %540 = dma.done %s536, 512
        $region64: #{tpu_custom_call.1} parent=59 // pred_fallthru
          _
      $region60: #{tpu_custom_call.1} parent=5 // pred_fallthru
        _
    $region6: #{tpu_custom_call.1} parent=1 // loop_footer
      %s22 = sadd.s32 1, %s18
    $region7: #{tpu_custom_call.1} parent=1 // loop_footer_branch
      %17 = sbr.rel target = $region3
    $region8: #{tpu_custom_call.1} parent=1 // loop_exit
      _
    %541 = vsyncpa [#allocation3], 1
    %s542 = scalar_lea.sflag [#allocation3], 1
    %543 = vsyncpa %s542, 1
    %544 = vsyncpa [#allocation6], 1
    %545 = vsyncpa [#allocation4], 1
    %s546 = scalar_lea.sflag [#allocation4], 1
    %547 = vsyncpa %s546, 1

</llo_original>
